<compile_context>
chip_gen: v7x
topology: tpu7x:2x2x1
jax: 0.10.0
libtpu: 0.0.40
codegen_flags: <defaults>
</compile_context>

<pallas_src>
import jax
import jax.numpy as jnp
from jax.experimental import pallas as pl
from jax.experimental.pallas import tpu as pltpu

LANE = 128      # TPU vreg lane width
OUT_SIZE = 1    # module spec: final Linear(hidden_size, 1)


def mlp_kernel(x_ref, p_ref, o_ref):
    # x: (B, in)    p: (in + 3, Hp)    o: (B, OUT_SIZE)    Hp = hidden padded to 128 lanes
    # p rows: [0, in) -> w1 rows | in -> b1 | in+1 -> w2^T | in+2 -> b2 (broadcast on lanes)
    in_size = x_ref.shape[1]
    x = x_ref[...]

    # Layer 1: affine + ReLU, pure VPU broadcast multiply-add (no MXU at in=1/hidden=10).
    h = p_ref[in_size:in_size + 1, :]                          # b1 row, (1, Hp)
    for i in range(in_size):                                   # static, tiny loop (in = 1)
        h = h + x[:, i:i + 1] * p_ref[i:i + 1, :]              # (B,1)*(1,Hp) -> (B,Hp)
    h = jnp.maximum(h, 0.0)                                    # ReLU; zero-padded lanes stay 0

    # Layer 2: elementwise by w2^T row, full-lane XLU reduce; padded lanes contribute 0.
    y = jnp.sum(h * p_ref[in_size + 1:in_size + 2, :], axis=-1, keepdims=True)   # (B, 1)

    # Direct (B, out_size) store; b2 read from lane 0 of the last slab row.
    o_ref[...] = y + p_ref[in_size + 2:in_size + 3, :OUT_SIZE]


def prepare_params(w1, b1, w2, b2):
    """One-time packing of all weights/biases into one lane-dense VMEM slab.

    Call once after loading/initializing weights — NOT on the per-inference path.
    Built with a single concatenate of pre-padded rows (one XLA fusion).
    """
    in_size, hidden = w1.shape
    assert w2.shape == (hidden, OUT_SIZE), "kernel specialized for out_size == 1"
    hp = LANE * pl.cdiv(hidden, LANE)
    pad = ((0, 0), (0, hp - hidden))
    rows = [
        jnp.pad(jnp.asarray(w1, jnp.float32), pad),                                 # w1 rows
        jnp.pad(jnp.asarray(b1, jnp.float32).reshape(1, hidden), pad),              # b1
        jnp.pad(jnp.asarray(w2, jnp.float32).reshape(hidden, 1).T, pad),            # w2^T
        jnp.full((1, hp), jnp.asarray(b2, jnp.float32).reshape(()), jnp.float32),   # b2
    ]
    return jnp.concatenate(rows, axis=0)                                            # (in+3, Hp)


@jax.jit
def income_predictor(x, params):
    B, in_size = x.shape
    hp = params.shape[1]
    x = x.astype(jnp.float32)
    return pl.pallas_call(
        mlp_kernel,
        out_shape=jax.ShapeDtypeStruct((B, OUT_SIZE), jnp.float32),
        in_specs=[
            pl.BlockSpec(memory_space=pltpu.MemorySpace.VMEM),
            pl.BlockSpec(memory_space=pltpu.MemorySpace.VMEM),
        ],
        out_specs=pl.BlockSpec(memory_space=pltpu.MemorySpace.VMEM),
        cost_estimate=pl.CostEstimate(
            flops=B * (2 * in_size * hp + 3 * hp + OUT_SIZE),
            transcendentals=0,
            bytes_accessed=4 * (x.size + params.size + B * OUT_SIZE),
        ),
    )(x, params)


def init_params(key, in_size, hidden_size, out_size):
    # Deterministic init mirroring nn.Linear default: U(-1/sqrt(fan_in), 1/sqrt(fan_in))
    k1, k2, k3, k4 = jax.random.split(key, 4)
    bound1 = 1.0 / (in_size ** 0.5)
    bound2 = 1.0 / (hidden_size ** 0.5)
    w1 = jax.random.uniform(k1, (in_size, hidden_size), jnp.float32, -bound1, bound1)
    b1 = jax.random.uniform(k2, (hidden_size,), jnp.float32, -bound1, bound1)
    w2 = jax.random.uniform(k3, (hidden_size, out_size), jnp.float32, -bound2, bound2)
    b2 = jax.random.uniform(k4, (out_size,), jnp.float32, -bound2, bound2)
    return w1, b1, w2, b2


if __name__ == "__main__":
    key = jax.random.PRNGKey(0)
    in_size, hidden_size, out_size = 1, 10, 1
    batch = 8

    kx, kp = jax.random.split(key)
    x = jax.random.normal(kx, (batch, in_size), jnp.float32)
    w1, b1, w2, b2 = init_params(kp, in_size, hidden_size, out_size)

    params = prepare_params(w1, b1, w2, b2)   # one-time packing, off the hot path
    y = income_predictor(x, params)
    jax.block_until_ready(y)

    # Reference check in plain JAX (same math as the PyTorch module).
    y_ref = jnp.maximum(x @ w1 + b1[None, :], 0.0) @ w2 + b2[None, :]
    assert y.shape == y_ref.shape, "shape mismatch vs reference"
    assert jnp.allclose(y, y_ref, atol=1e-5), "mismatch vs reference"
    print("KERNEL_OK")
</pallas_src>

<mosaic_0001>
module attributes {stable_mosaic.version = 11 : i64} {
  func.func @mlp_kernel(%arg0: memref<8x1xf32, #tpu.memory_space<vmem>>, %arg1: memref<4x128xf32, #tpu.memory_space<vmem>>, %arg2: memref<8x1xf32, #tpu.memory_space<vmem>>) attributes {dimension_semantics = [], scalar_prefetch = 0 : i64, scratch_operands = 0 : i64, tpu.core_type = #tpu.core_type<tc>} {
    %c0 = arith.constant 0 : index
    %c0_0 = arith.constant 0 : index
    %0 = vector.load %arg0[%c0, %c0_0] : memref<8x1xf32, #tpu.memory_space<vmem>>, vector<8x1xf32>
    %c1 = arith.constant 1 : index
    %c0_1 = arith.constant 0 : index
    %1 = vector.load %arg1[%c1, %c0_1] : memref<4x128xf32, #tpu.memory_space<vmem>>, vector<1x128xf32>
    %c0_2 = arith.constant 0 : index
    %c0_3 = arith.constant 0 : index
    %2 = vector.load %arg1[%c0_2, %c0_3] : memref<4x128xf32, #tpu.memory_space<vmem>>, vector<1x128xf32>
    %3 = vector.broadcast %0 : vector<8x1xf32> to vector<8x128xf32>
    %4 = vector.broadcast %2 : vector<1x128xf32> to vector<8x128xf32>
    %5 = arith.mulf %3, %4 : vector<8x128xf32>
    %6 = vector.broadcast %1 : vector<1x128xf32> to vector<8x128xf32>
    %7 = arith.addf %6, %5 : vector<8x128xf32>
    %cst = arith.constant 0.000000e+00 : f32
    %8 = vector.broadcast %cst : f32 to vector<8x128xf32>
    %9 = arith.maximumf %7, %8 : vector<8x128xf32>
    %c2 = arith.constant 2 : index
    %c0_4 = arith.constant 0 : index
    %10 = vector.load %arg1[%c2, %c0_4] : memref<4x128xf32, #tpu.memory_space<vmem>>, vector<1x128xf32>
    %11 = vector.broadcast %10 : vector<1x128xf32> to vector<8x128xf32>
    %12 = arith.mulf %9, %11 : vector<8x128xf32>
    %cst_5 = arith.constant dense<0.000000e+00> : vector<8xf32>
    %13 = vector.multi_reduction <add>, %12, %cst_5 [1] : vector<8x128xf32> to vector<8xf32>
    %14 = vector.shape_cast %13 : vector<8xf32> to vector<8x1xf32>
    %c3 = arith.constant 3 : index
    %c0_6 = arith.constant 0 : index
    %15 = vector.load %arg1[%c3, %c0_6] : memref<4x128xf32, #tpu.memory_space<vmem>>, vector<1x1xf32>
    %16 = vector.broadcast %15 : vector<1x1xf32> to vector<8x1xf32>
    %17 = arith.addf %14, %16 : vector<8x1xf32>
    %c0_7 = arith.constant 0 : index
    %c0_8 = arith.constant 0 : index
    %18 = vector.load %arg2[%c0_7, %c0_8] : memref<8x1xf32, #tpu.memory_space<vmem>>, vector<8x1xf32>
    tpu.vector_store %arg2[%c0_7, %c0_8], %17 {strides = array<i32>} : memref<8x1xf32, #tpu.memory_space<vmem>>, vector<8x1xf32>,
    return
  }
}

</mosaic_0001>

<llo_original>
// kernel: income_predictor.1
$region0: #{income_predictor.1}
  #allocation0 [shape = 'u32[]', space=smem, size = 0x4, offset = 0x4, fixed_abs, tag = 'smem constant byte address 0x4 - core index']
  #allocation1 [shape = 'u32[144,128]{1,0:T(1,128)}', space=vmem, size = 0x12000, scoped, tag = 'internal scratch']
  %s0 = inlined_call_operand.vmem [shape: f32[8,1], index: 0, kind: input, shape index: {}]
  %s1 = inlined_call_operand.vmem [shape: f32[4,128], index: 1, kind: input, shape index: {}]
  %s2 = inlined_call_operand.vmem [shape: f32[8,1], index: 2, kind: output, shape index: {}]
  %s3 = sld [smem:[#allocation0]]
  $region18: #{income_predictor.1} parent=0
    _
  %s5 = ssub.s32 1, %s3
  %s6 = scalar_select 0, %s5, %s3
  // Predicated region
  $region2: #{income_predictor.1} parent=0 // pred_check
    _
  $region3: #{income_predictor.1} parent=0 // pred_check_branch
    %8 = sbr.rel (0) target = $region5
  $region4: #{income_predictor.1} parent=0 // pred_region
    _
  $region5: #{income_predictor.1} parent=0 // pred_fallthru
    _
  // Predicated region
  $region6: #{income_predictor.1} parent=0 // pred_check
    _
  $region7: #{income_predictor.1} parent=0 // pred_check_branch
    %10 = sbr.rel (0) target = $region9
  $region8: #{income_predictor.1} parent=0 // pred_region
    _
  $region9: #{income_predictor.1} parent=0 // pred_fallthru
    _
  %v11 = vld [vmem:[%s0] sm:$0xff]
  %v12 = vld [vmem:[%s1 + $0x1] sm:$0x1]
  %v13 = vld [vmem:[%s1] sm:$0x1]
  %15 = vset.pattern.permute.xlu0 0
  %16 = vperm.xlu0 %15, %v11
  %v17 = vpop.permute.xlu0 %16
  %v19 = vlaneseq
  %v20 = vshrl.u32 %v19, 7
  %v21 = vsub.s32 0, %v20
  %v22 = vrot.slane %v13, %v21
  %v23 = vmul.f32 %v17, %v22
  %v24 = vlaneseq
  %v25 = vshrl.u32 %v24, 7
  %v26 = vsub.s32 0, %v25
  %v27 = vrot.slane %v12, %v26
  %v28 = vadd.f32 %v27, %v23
  %v29 = vmax.f32 %v28, 0.0
  %v30 = vld [vmem:[%s1 + $0x2] sm:$0x1]
  %v31 = vlaneseq
  %v32 = vshrl.u32 %v31, 7
  %v33 = vsub.s32 0, %v32
  %v34 = vrot.slane %v30, %v33
  %v35 = vmul.f32 %v29, %v34
  %36 = vadd.xlane.f32.xlu0 %v35
  %v37 = vpop.xlane.xlu0 %36
  %v38 = vld [vmem:[%s1 + $0x3] sm:$0x1]
  %v39 = vlaneseq
  %v40 = vshrl.u32 %v39, 7
  %v41 = vsub.s32 0, %v40
  %v42 = vrot.slane %v38, %v41
  %v43 = vadd.f32 %v37, %v42
  %vm44 = vcmask 7168
  %45 = vst.msk [vmem:[%s2] sm:$0xff] %vm44, %v43
  // Predicated region
  $region10: #{income_predictor.1} parent=0 // pred_check
    _
  $region11: #{income_predictor.1} parent=0 // pred_check_branch
    %47 = sbr.rel (0) target = $region13
  $region12: #{income_predictor.1} parent=0 // pred_region
    _
  $region13: #{income_predictor.1} parent=0 // pred_fallthru
    _
  // Predicated region
  $region14: #{income_predictor.1} parent=0 // pred_check
    _
  $region15: #{income_predictor.1} parent=0 // pred_check_branch
    %49 = sbr.rel (0) target = $region17
  $region16: #{income_predictor.1} parent=0 // pred_region
    _
  $region17: #{income_predictor.1} parent=0 // pred_fallthru
    _

</llo_original>
